<compile_context>
chip_gen: v7x
topology: tpu7x:2x2x1
jax: 0.10.0
libtpu: 0.0.40
codegen_flags: <defaults>
</compile_context>

<pallas_src>
import functools

import numpy as np

import jax
import jax.numpy as jnp
from jax import lax
from jax.experimental import pallas as pl
from jax.experimental.pallas import tpu as pltpu


_TN_TARGET = 1024  # node-tile size for large N (review: 1024-4096; keep modest for v7x VMEM)


def _round_up(n, m):
    return -(-n // m) * m


def _pack_params(entries, width):
    """Vertically pack small 2-D f32 arrays into one [R, width] buffer.

    Each entry starts on an 8-row (sublane) boundary; static slices inside the kernel
    are free views.  Returns (buffer, offsets) with offsets[name] = (row, n_rows, n_cols).
    """
    offsets = {}
    parts = []
    row = 0
    for name, arr in entries:
        a = jnp.asarray(arr, jnp.float32)
        if a.ndim == 1:
            a = a.reshape(1, -1)
        h, w = a.shape
        assert w <= width, (name, w, width)
        pad_r = (-row) % 8
        if pad_r:
            parts.append(jnp.zeros((pad_r, width), jnp.float32))
            row += pad_r
        if w < width:
            a = jnp.pad(a, ((0, 0), (0, width - w)))
        parts.append(a)
        offsets[name] = (row, h, w)
        row += h
    pad_r = (-row) % 8
    if pad_r:
        parts.append(jnp.zeros((pad_r, width), jnp.float32))
        row += pad_r
    return jnp.concatenate(parts, axis=0), offsets


def _rbfann_kernel(x_ref, pos_ref, batch_ref, loopp_ref, tailp_ref, out_ref, feat_acc,
                   *, num_graphs, off_loop, off_tail, negative_slope, ln_eps):
    step = pl.program_id(0)
    last = pl.num_programs(0) - 1

    def LP(name):                               # static view into the per-step param buffer
        r, h, w = off_loop[name]
        return loopp_ref[r:r + h, 0:w]

    def TP(name):                               # static view into the epilogue param buffer
        r, h, w = off_tail[name]
        return tailp_ref[r:r + h, 0:w]

    @pl.when(step == 0)
    def _init():
        feat_acc[...] = jnp.zeros_like(feat_acc)

    x = x_ref[...]                              # [TN, D]
    pos = pos_ref[...]                          # [TN, 3]
    batch_row = batch_ref[...]                  # [1, TN] int32 (-1 on padded rows)
    tn = batch_row.shape[1]

    # ---- x1 = self.x1(x): Linear(D -> H)
    x1 = jnp.dot(x, LP("w1t"), preferred_element_type=jnp.float32) + LP("b1")        # [TN, H]

    # ---- gaussian_rbf(pos): distances via matmul identity; width scaling hoisted off EUP
    pc = jnp.dot(pos, LP("centers_t"), preferred_element_type=jnp.float32)           # [TN, C]
    pnorm2 = jnp.sum(pos * pos, axis=-1, keepdims=True)                              # [TN, 1]
    d2 = jnp.maximum(pnorm2 + LP("cnorm2") - 2.0 * pc, 0.0)                          # [TN, C]
    rbf = jnp.exp(jnp.sqrt(d2) * LP("neg_inv_w2"))                                   # [TN, C]

    # ---- M[n, c*H + h] = rbf[n, c] * x1[n, h], built lane-dense with MXU broadcast matrices
    M = (jnp.dot(rbf, LP("expand_c"), preferred_element_type=jnp.float32)
         * jnp.dot(x1, LP("tile_h"), preferred_element_type=jnp.float32))            # [TN, C*H]

    # ---- scatter_add over graphs as one [B, TN] x [TN, C*H] matmul
    giota = lax.broadcasted_iota(jnp.int32, (num_graphs, tn), 0)
    onehot_t = (giota == batch_row).astype(jnp.float32)                              # [B, TN]
    feat_acc[...] += jnp.dot(onehot_t, M, preferred_element_type=jnp.float32)        # [B, C*H]

    @pl.when(step == last)
    def _epilogue():
        feat = feat_acc[...]                                                         # [B, C*H]
        # AttentionAggregation: logits over centers, softmax along C, weighted sum
        logits = jnp.dot(feat, TP("wa_block"), preferred_element_type=jnp.float32) + TP("ba")
        logits = logits - jnp.max(logits, axis=-1, keepdims=True)
        num = jnp.exp(logits)
        att = num / jnp.sum(num, axis=-1, keepdims=True)                             # [B, C]
        att_exp = jnp.dot(att, LP("expand_c"), preferred_element_type=jnp.float32)   # [B, C*H]
        agg = jnp.dot(feat * att_exp, TP("sum_c"), preferred_element_type=jnp.float32)  # [B, H]

        # self.norm(self.ReLU(self.x2(agg)))
        z = jnp.dot(agg, TP("w2t"), preferred_element_type=jnp.float32) + TP("b2")   # [B, D]
        z = jnp.where(z >= 0, z, negative_slope * z)                                 # LeakyReLU(0.2)
        mean = jnp.mean(z, axis=-1, keepdims=True)
        var = jnp.mean((z - mean) * (z - mean), axis=-1, keepdims=True)
        y = (z - mean) * lax.rsqrt(var + ln_eps) * TP("ln_gamma") + TP("ln_beta")

        # self.x3(y): Linear(D -> 1)
        out_ref[...] = jnp.dot(y, TP("w3t"), preferred_element_type=jnp.float32) + TP("b3")


def rbfann_forward(params, x, pos, batch, num_graphs):
    """Pallas wrapper. x:[N,D], pos:[N,3], batch:[N] int32 -> [num_graphs, 1]."""
    n, d = x.shape
    hs = params["w1"].shape[0]
    c = params["centers"].shape[0]
    ch = c * hs

    # ---- node tiling (pad N up; padded rows get batch=-1 so they contribute nothing)
    tn = min(_TN_TARGET, _round_up(max(n, 1), 8))
    n_pad = _round_up(n, tn)
    grid = (n_pad // tn,)

    x_p = jnp.zeros((n_pad, d), jnp.float32).at[:n, :].set(x.astype(jnp.float32))
    pos_p = jnp.zeros((n_pad, 3), jnp.float32).at[:n, :].set(pos.astype(jnp.float32))
    batch_p = jnp.full((1, n_pad), -1, jnp.int32).at[0, :n].set(batch.astype(jnp.int32))

    # ---- constant lane-expansion matrices (turn broadcasts / reductions into MXU work)
    eye_c = jnp.eye(c, dtype=jnp.float32)
    eye_h = jnp.eye(hs, dtype=jnp.float32)
    expand_c = jnp.kron(eye_c, jnp.ones((1, hs), jnp.float32))            # [C, C*H]: rbf -> lanes
    tile_h = jnp.kron(jnp.ones((1, c), jnp.float32), eye_h)               # [H, C*H]: tile x1
    wa_block = jnp.kron(eye_c, params["wa"].astype(jnp.float32).reshape(hs, 1))  # [C*H, C]
    sum_c = jnp.kron(jnp.ones((c, 1), jnp.float32), eye_h)                # [C*H, H]: sum over C

    # ---- coalesce parameters into two packed VMEM buffers (2 DMAs instead of ~16)
    loop_buf, off_loop = _pack_params([
        ("tile_h", tile_h),
        ("expand_c", expand_c),
        ("w1t", params["w1"].T),
        ("b1", params["b1"]),
        ("centers_t", params["centers"].T),
        ("cnorm2", jnp.sum(params["centers"].astype(jnp.float32) ** 2, axis=1)),
        ("neg_inv_w2", -1.0 / (params["widths"].astype(jnp.float32) ** 2)),
    ], width=ch)

    tail_buf, off_tail = _pack_params([
        ("wa_block", wa_block),
        ("sum_c", sum_c),
        ("w2t", params["w2"].T),
        ("b2", params["b2"]),
        ("ln_gamma", params["ln_gamma"]),
        ("ln_beta", params["ln_beta"]),
        ("w3t", params["w3"].T),
        ("b3", params["b3"]),
        ("ba", params["ba"]),
    ], width=max(hs, d, c))

    kernel = functools.partial(
        _rbfann_kernel,
        num_graphs=num_graphs,
        off_loop=off_loop,
        off_tail=off_tail,
        negative_slope=0.2,
        ln_eps=1e-5,
    )

    flops = 2 * n_pad * (d * hs + 3 * c + c * ch + hs * ch + num_graphs * ch)
    transcendentals = 2 * n_pad * c + num_graphs * c
    bytes_accessed = 4 * (n_pad * (d + 3 + 1) + loop_buf.size + tail_buf.size + num_graphs)

    return pl.pallas_call(
        kernel,
        out_shape=jax.ShapeDtypeStruct((num_graphs, 1), jnp.float32),
        grid_spec=pltpu.PrefetchScalarGridSpec(
            num_scalar_prefetch=0,
            grid=grid,
            in_specs=[
                pl.BlockSpec((tn, d), lambda i: (i, 0)),
                pl.BlockSpec((tn, 3), lambda i: (i, 0)),
                pl.BlockSpec((1, tn), lambda i: (0, i)),
                pl.BlockSpec(loop_buf.shape, lambda i: (0, 0)),
                pl.BlockSpec(tail_buf.shape, lambda i: (0, 0)),
            ],
            out_specs=pl.BlockSpec((num_graphs, 1), lambda i: (0, 0)),
            scratch_shapes=[pltpu.VMEM((num_graphs, ch), jnp.float32)],
        ),
        compiler_params=pltpu.CompilerParams(
            dimension_semantics=("arbitrary",),
            vmem_limit_bytes=32 * 1024 * 1024,
        ),
        cost_estimate=pl.CostEstimate(
            flops=int(flops),
            transcendentals=int(transcendentals),
            bytes_accessed=int(bytes_accessed),
        ),
    )(x_p, pos_p, batch_p, loop_buf, tail_buf)


def rbfann_reference(params, x, pos, batch, num_graphs):
    """Pure-JAX reference mirroring the PyTorch forward exactly."""
    x1 = x @ params["w1"].T + params["b1"]
    dist = jnp.sqrt(jnp.sum((pos[:, None, :] - params["centers"][None, :, :]) ** 2, axis=2))
    rbf = jnp.exp(-dist / params["widths"] ** 2)
    mul = rbf[:, :, None] * x1[:, None, :]                          # [N, C, H]
    onehot = jax.nn.one_hot(batch, num_graphs, dtype=x.dtype)       # [N, B]
    rbf_feature = jnp.einsum("nb,nch->bch", onehot, mul)            # scatter_add
    w = rbf_feature @ params["wa"].T + params["ba"]                 # [B, C, 1]
    att = jax.nn.softmax(w, axis=1)
    agg = jnp.sum(att * rbf_feature, axis=1)                        # [B, H]
    z = agg @ params["w2"].T + params["b2"]
    z = jnp.where(z >= 0, z, 0.2 * z)
    mean = jnp.mean(z, axis=-1, keepdims=True)
    var = jnp.mean((z - mean) ** 2, axis=-1, keepdims=True)
    y = (z - mean) / jnp.sqrt(var + 1e-5) * params["ln_gamma"] + params["ln_beta"]
    return y @ params["w3"].T + params["b3"]


if __name__ == "__main__":
    # N nodes, input_dim D, hidden hs, num_centers C, num_graphs B
    N, D, H, C, B = 16, 8, 32, 8, 2

    key = jax.random.PRNGKey(0)
    keys = jax.random.split(key, 12)
    params = {
        "centers": jax.random.normal(keys[0], (C, 3), jnp.float32),     # nn.Parameter randn
        "widths": jnp.ones((C,), jnp.float32),                          # nn.Parameter ones
        "w1": jax.random.normal(keys[1], (H, D), jnp.float32) * 0.1,    # x1: Linear(D, H)
        "b1": jax.random.normal(keys[2], (H,), jnp.float32) * 0.1,
        "wa": jax.random.normal(keys[3], (1, H), jnp.float32) * 0.1,    # attention.W: Linear(H, 1)
        "ba": jax.random.normal(keys[4], (1,), jnp.float32) * 0.1,
        "w2": jax.random.normal(keys[5], (D, H), jnp.float32) * 0.1,    # x2: Linear(H, D)
        "b2": jax.random.normal(keys[6], (D,), jnp.float32) * 0.1,
        "ln_gamma": jnp.ones((D,), jnp.float32),                        # LayerNorm(D) defaults
        "ln_beta": jnp.zeros((D,), jnp.float32),
        "w3": jax.random.normal(keys[7], (1, D), jnp.float32) * 0.1,    # x3: Linear(D, 1)
        "b3": jax.random.normal(keys[8], (1,), jnp.float32) * 0.1,
    }

    x = jax.random.normal(keys[9], (N, D), jnp.float32)
    pos = jax.random.normal(keys[10], (N, 3), jnp.float32)
    batch = jnp.repeat(jnp.arange(B, dtype=jnp.int32), N // B)          # [N] graph ids

    out = rbfann_forward(params, x, pos, batch, B)
    out = jax.block_until_ready(out)

    ref = rbfann_reference(params, x, pos, batch, B)
    assert out.shape == (B, 1), out.shape
    np.testing.assert_allclose(np.asarray(out), np.asarray(ref), rtol=2e-3, atol=2e-3)
    print("KERNEL_OK")
</pallas_src>

<mosaic_0001>
module attributes {stable_mosaic.version = 11 : i64} {
  func.func @_rbfann_kernel(%arg0: i32, %arg1: memref<16x8xf32, #tpu.memory_space<vmem>>, %arg2: memref<16x3xf32, #tpu.memory_space<vmem>>, %arg3: memref<1x16xi32, #tpu.memory_space<vmem>>, %arg4: memref<80x256xf32, #tpu.memory_space<vmem>>, %arg5: memref<592x32xf32, #tpu.memory_space<vmem>>, %arg6: memref<2x1xf32, #tpu.memory_space<vmem>>, %arg7: memref<2x256xf32, #tpu.memory_space<vmem>>) attributes {dimension_semantics = [#tpu.dimension_semantics<arbitrary>], iteration_bounds = array<i64: 1>, scalar_prefetch = 0 : i64, scratch_operands = 1 : i64, tpu.core_type = #tpu.core_type<tc>, window_params = [{transform_indices = @transform_0, window_bounds = array<i64: 16, 8>}, {transform_indices = @transform_1, window_bounds = array<i64: 16, 3>}, {transform_indices = @transform_2, window_bounds = array<i64: 1, 16>}, {pipeline_mode = #tpu.pipeline_mode<synchronous>, transform_indices = @transform_3, window_bounds = array<i64: 80, 256>}, {pipeline_mode = #tpu.pipeline_mode<synchronous>, transform_indices = @transform_4, window_bounds = array<i64: 592, 32>}, {pipeline_mode = #tpu.pipeline_mode<synchronous>, transform_indices = @transform_5, window_bounds = array<i64: 2, 1>}]} {
    %c0_i32 = arith.constant 0 : i32
    %0 = arith.cmpi eq, %arg0, %c0_i32 : i32
    %1 = arith.extui %0 : i1 to i32
    %c0_i32_0 = arith.constant 0 : i32
    %2 = arith.cmpi ne, %1, %c0_i32_0 : i32
    scf.if %2 {
      %cst_27 = arith.constant 0.000000e+00 : f32
      %47 = vector.broadcast %cst_27 : f32 to vector<2x256xf32>
      %c0_28 = arith.constant 0 : index
      %c0_29 = arith.constant 0 : index
      %48 = vector.load %arg7[%c0_28, %c0_29] : memref<2x256xf32, #tpu.memory_space<vmem>>, vector<2x256xf32>
      tpu.vector_store %arg7[%c0_28, %c0_29], %47 {strides = array<i32>} : memref<2x256xf32, #tpu.memory_space<vmem>>, vector<2x256xf32>,
    } else {
    }
    %c0 = arith.constant 0 : index
    %c0_1 = arith.constant 0 : index
    %3 = vector.load %arg1[%c0, %c0_1] : memref<16x8xf32, #tpu.memory_space<vmem>>, vector<16x8xf32>
    %c0_2 = arith.constant 0 : index
    %c0_3 = arith.constant 0 : index
    %4 = vector.load %arg2[%c0_2, %c0_3] : memref<16x3xf32, #tpu.memory_space<vmem>>, vector<16x3xf32>
    %c0_4 = arith.constant 0 : index
    %c0_5 = arith.constant 0 : index
    %5 = vector.load %arg3[%c0_4, %c0_5] : memref<1x16xi32, #tpu.memory_space<vmem>>, vector<1x16xi32>
    %c40 = arith.constant 40 : index
    %c0_6 = arith.constant 0 : index
    %6 = vector.load %arg4[%c40, %c0_6] : memref<80x256xf32, #tpu.memory_space<vmem>>, vector<8x32xf32>
    %cst = arith.constant dense<0.000000e+00> : vector<16x32xf32>
    %7 = tpu.matmul %3, %6, %cst {dimension_numbers = #tpu.dot_dimension_numbers<[1], [0], [0], [1], [0, 0, 1, 1], [], []>} : vector<16x8xf32>, vector<8x32xf32>, vector<16x32xf32> -> vector<16x32xf32>
    %c48 = arith.constant 48 : index
    %c0_7 = arith.constant 0 : index
    %8 = vector.load %arg4[%c48, %c0_7] : memref<80x256xf32, #tpu.memory_space<vmem>>, vector<1x32xf32>
    %9 = vector.broadcast %8 : vector<1x32xf32> to vector<16x32xf32>
    %10 = arith.addf %7, %9 : vector<16x32xf32>
    %c56 = arith.constant 56 : index
    %c0_8 = arith.constant 0 : index
    %11 = vector.load %arg4[%c56, %c0_8] : memref<80x256xf32, #tpu.memory_space<vmem>>, vector<3x8xf32>
    %cst_9 = arith.constant dense<0.000000e+00> : vector<16x8xf32>
    %12 = tpu.matmul %4, %11, %cst_9 {dimension_numbers = #tpu.dot_dimension_numbers<[1], [0], [0], [1], [0, 0, 1, 1], [], []>} : vector<16x3xf32>, vector<3x8xf32>, vector<16x8xf32> -> vector<16x8xf32>
    %13 = arith.mulf %4, %4 : vector<16x3xf32>
    %cst_10 = arith.constant dense<0.000000e+00> : vector<16xf32>
    %14 = vector.multi_reduction <add>, %13, %cst_10 [1] : vector<16x3xf32> to vector<16xf32>
    %15 = vector.shape_cast %14 : vector<16xf32> to vector<16x1xf32>
    %c64 = arith.constant 64 : index
    %c0_11 = arith.constant 0 : index
    %16 = vector.load %arg4[%c64, %c0_11] : memref<80x256xf32, #tpu.memory_space<vmem>>, vector<1x8xf32>
    %17 = vector.broadcast %15 : vector<16x1xf32> to vector<16x8xf32>
    %18 = vector.broadcast %16 : vector<1x8xf32> to vector<16x8xf32>
    %19 = arith.addf %17, %18 : vector<16x8xf32>
    %cst_12 = arith.constant 2.000000e+00 : f32
    %20 = vector.broadcast %cst_12 : f32 to vector<16x8xf32>
    %21 = arith.mulf %20, %12 : vector<16x8xf32>
    %22 = arith.subf %19, %21 : vector<16x8xf32>
    %cst_13 = arith.constant 0.000000e+00 : f32
    %23 = vector.broadcast %cst_13 : f32 to vector<16x8xf32>
    %24 = arith.maximumf %22, %23 : vector<16x8xf32>
    %25 = math.sqrt %24 : vector<16x8xf32>
    %c72 = arith.constant 72 : index
    %c0_14 = arith.constant 0 : index
    %26 = vector.load %arg4[%c72, %c0_14] : memref<80x256xf32, #tpu.memory_space<vmem>>, vector<1x8xf32>
    %27 = vector.broadcast %26 : vector<1x8xf32> to vector<16x8xf32>
    %28 = arith.mulf %25, %27 : vector<16x8xf32>
    %29 = math.exp %28 : vector<16x8xf32>
    %c32 = arith.constant 32 : index
    %c0_15 = arith.constant 0 : index
    %30 = vector.load %arg4[%c32, %c0_15] : memref<80x256xf32, #tpu.memory_space<vmem>>, vector<8x256xf32>
    %cst_16 = arith.constant dense<0.000000e+00> : vector<16x256xf32>
    %31 = tpu.matmul %29, %30, %cst_16 {dimension_numbers = #tpu.dot_dimension_numbers<[1], [0], [0], [1], [0, 0, 1, 1], [], []>} : vector<16x8xf32>, vector<8x256xf32>, vector<16x256xf32> -> vector<16x256xf32>
    %c0_17 = arith.constant 0 : index
    %c0_18 = arith.constant 0 : index
    %32 = vector.load %arg4[%c0_17, %c0_18] : memref<80x256xf32, #tpu.memory_space<vmem>>, vector<32x256xf32>
    %cst_19 = arith.constant dense<0.000000e+00> : vector<16x256xf32>
    %33 = tpu.matmul %10, %32, %cst_19 {dimension_numbers = #tpu.dot_dimension_numbers<[1], [0], [0], [1], [0, 0, 1, 1], [], []>} : vector<16x32xf32>, vector<32x256xf32>, vector<16x256xf32> -> vector<16x256xf32>
    %34 = arith.mulf %31, %33 : vector<16x256xf32>
    %35 = tpu.iota {dimensions = array<i32: 0>} : vector<2x16xi32>
    %36 = vector.broadcast %5 : vector<1x16xi32> to vector<2x16xi32>
    %37 = arith.cmpi eq, %35, %36 : vector<2x16xi32>
    %38 = arith.extui %37 : vector<2x16xi1> to vector<2x16xi32>
    %39 = arith.sitofp %38 : vector<2x16xi32> to vector<2x16xf32>
    %c0_20 = arith.constant 0 : index
    %c0_21 = arith.constant 0 : index
    %40 = vector.load %arg7[%c0_20, %c0_21] : memref<2x256xf32, #tpu.memory_space<vmem>>, vector<2x256xf32>
    %cst_22 = arith.constant dense<0.000000e+00> : vector<2x256xf32>
    %41 = tpu.matmul %39, %34, %cst_22 {dimension_numbers = #tpu.dot_dimension_numbers<[1], [0], [0], [1], [0, 0, 1, 1], [], []>} : vector<2x16xf32>, vector<16x256xf32>, vector<2x256xf32> -> vector<2x256xf32>
    %42 = arith.addf %40, %41 : vector<2x256xf32>
    %c0_23 = arith.constant 0 : index
    %c0_24 = arith.constant 0 : index
    %43 = vector.load %arg7[%c0_23, %c0_24] : memref<2x256xf32, #tpu.memory_space<vmem>>, vector<2x256xf32>
    tpu.vector_store %arg7[%c0_23, %c0_24], %42 {strides = array<i32>} : memref<2x256xf32, #tpu.memory_space<vmem>>, vector<2x256xf32>,
    %c0_i32_25 = arith.constant 0 : i32
    %44 = arith.cmpi eq, %arg0, %c0_i32_25 : i32
    %45 = arith.extui %44 : i1 to i32
    %c0_i32_26 = arith.constant 0 : i32
    %46 = arith.cmpi ne, %45, %c0_i32_26 : i32
    scf.if %46 {
      %c0_27 = arith.constant 0 : index
      %c0_28 = arith.constant 0 : index
      %47 = vector.load %arg7[%c0_27, %c0_28] : memref<2x256xf32, #tpu.memory_space<vmem>>, vector<2x256xf32>
      %c0_29 = arith.constant 0 : index
      %c0_30 = arith.constant 0 : index
      %48 = vector.load %arg5[%c0_29, %c0_30] : memref<592x32xf32, #tpu.memory_space<vmem>>, vector<256x8xf32>
      %cst_31 = arith.constant dense<0.000000e+00> : vector<2x8xf32>
      %49 = tpu.matmul %47, %48, %cst_31 {dimension_numbers = #tpu.dot_dimension_numbers<[1], [0], [0], [1], [0, 0, 1, 1], [], []>} : vector<2x256xf32>, vector<256x8xf32>, vector<2x8xf32> -> vector<2x8xf32>
      %c584 = arith.constant 584 : index
      %c0_32 = arith.constant 0 : index
      %50 = vector.load %arg5[%c584, %c0_32] : memref<592x32xf32, #tpu.memory_space<vmem>>, vector<1x1xf32>
      %51 = vector.broadcast %50 : vector<1x1xf32> to vector<2x8xf32>
      %52 = arith.addf %49, %51 : vector<2x8xf32>
      %cst_33 = arith.constant dense<0xFF800000> : vector<2xf32>
      %53 = vector.multi_reduction <maximumf>, %52, %cst_33 [1] : vector<2x8xf32> to vector<2xf32>
      %54 = vector.shape_cast %53 : vector<2xf32> to vector<2x1xf32>
      %55 = vector.broadcast %54 : vector<2x1xf32> to vector<2x8xf32>
      %56 = arith.subf %52, %55 : vector<2x8xf32>
      %57 = math.exp %56 : vector<2x8xf32>
      %cst_34 = arith.constant dense<0.000000e+00> : vector<2xf32>
      %58 = vector.multi_reduction <add>, %57, %cst_34 [1] : vector<2x8xf32> to vector<2xf32>
      %59 = vector.shape_cast %58 : vector<2xf32> to vector<2x1xf32>
      %60 = vector.broadcast %59 : vector<2x1xf32> to vector<2x8xf32>
      %61 = arith.divf %57, %60 : vector<2x8xf32>
      %c32_35 = arith.constant 32 : index
      %c0_36 = arith.constant 0 : index
      %62 = vector.load %arg4[%c32_35, %c0_36] : memref<80x256xf32, #tpu.memory_space<vmem>>, vector<8x256xf32>
      %cst_37 = arith.constant dense<0.000000e+00> : vector<2x256xf32>
      %63 = tpu.matmul %61, %62, %cst_37 {dimension_numbers = #tpu.dot_dimension_numbers<[1], [0], [0], [1], [0, 0, 1, 1], [], []>} : vector<2x8xf32>, vector<8x256xf32>, vector<2x256xf32> -> vector<2x256xf32>
      %64 = arith.mulf %47, %63 : vector<2x256xf32>
      %c256 = arith.constant 256 : index
      %c0_38 = arith.constant 0 : index
      %65 = vector.load %arg5[%c256, %c0_38] : memref<592x32xf32, #tpu.memory_space<vmem>>, vector<256x32xf32>
      %cst_39 = arith.constant dense<0.000000e+00> : vector<2x32xf32>
      %66 = tpu.matmul %64, %65, %cst_39 {dimension_numbers = #tpu.dot_dimension_numbers<[1], [0], [0], [1], [0, 0, 1, 1], [], []>} : vector<2x256xf32>, vector<256x32xf32>, vector<2x32xf32> -> vector<2x32xf32>
      %c512 = arith.constant 512 : index
      %c0_40 = arith.constant 0 : index
      %67 = vector.load %arg5[%c512, %c0_40] : memref<592x32xf32, #tpu.memory_space<vmem>>, vector<32x8xf32>
      %cst_41 = arith.constant dense<0.000000e+00> : vector<2x8xf32>
      %68 = tpu.matmul %66, %67, %cst_41 {dimension_numbers = #tpu.dot_dimension_numbers<[1], [0], [0], [1], [0, 0, 1, 1], [], []>} : vector<2x32xf32>, vector<32x8xf32>, vector<2x8xf32> -> vector<2x8xf32>
      %c544 = arith.constant 544 : index
      %c0_42 = arith.constant 0 : index
      %69 = vector.load %arg5[%c544, %c0_42] : memref<592x32xf32, #tpu.memory_space<vmem>>, vector<1x8xf32>
      %70 = vector.broadcast %69 : vector<1x8xf32> to vector<2x8xf32>
      %71 = arith.addf %68, %70 : vector<2x8xf32>
      %cst_43 = arith.constant 0.000000e+00 : f32
      %72 = vector.broadcast %cst_43 : f32 to vector<2x8xf32>
      %73 = arith.cmpf oge, %71, %72 : vector<2x8xf32>
      %cst_44 = arith.constant 2.000000e-01 : f32
      %74 = vector.broadcast %cst_44 : f32 to vector<2x8xf32>
      %75 = arith.mulf %74, %71 : vector<2x8xf32>
      %76 = arith.select %73, %71, %75 : vector<2x8xi1>, vector<2x8xf32>
      %cst_45 = arith.constant dense<0.000000e+00> : vector<2xf32>
      %77 = vector.multi_reduction <add>, %76, %cst_45 [1] : vector<2x8xf32> to vector<2xf32>
      %78 = vector.shape_cast %77 : vector<2xf32> to vector<2x1xf32>
      %cst_46 = arith.constant 8.000000e+00 : f32
      %79 = vector.broadcast %cst_46 : f32 to vector<2x1xf32>
      %80 = arith.divf %78, %79 : vector<2x1xf32>
      %81 = vector.broadcast %80 : vector<2x1xf32> to vector<2x8xf32>
      %82 = arith.subf %76, %81 : vector<2x8xf32>
      %83 = vector.broadcast %80 : vector<2x1xf32> to vector<2x8xf32>
      %84 = arith.subf %76, %83 : vector<2x8xf32>
      %85 = arith.mulf %82, %84 : vector<2x8xf32>
      %cst_47 = arith.constant dense<0.000000e+00> : vector<2xf32>
      %86 = vector.multi_reduction <add>, %85, %cst_47 [1] : vector<2x8xf32> to vector<2xf32>
      %87 = vector.shape_cast %86 : vector<2xf32> to vector<2x1xf32>
      %cst_48 = arith.constant 8.000000e+00 : f32
      %88 = vector.broadcast %cst_48 : f32 to vector<2x1xf32>
      %89 = arith.divf %87, %88 : vector<2x1xf32>
      %90 = vector.broadcast %80 : vector<2x1xf32> to vector<2x8xf32>
      %91 = arith.subf %76, %90 : vector<2x8xf32>
      %cst_49 = arith.constant 9.99999974E-6 : f32
      %92 = vector.broadcast %cst_49 : f32 to vector<2x1xf32>
      %93 = arith.addf %89, %92 : vector<2x1xf32>
      %94 = math.rsqrt %93 : vector<2x1xf32>
      %95 = vector.broadcast %94 : vector<2x1xf32> to vector<2x8xf32>
      %96 = arith.mulf %91, %95 : vector<2x8xf32>
      %c552 = arith.constant 552 : index
      %c0_50 = arith.constant 0 : index
      %97 = vector.load %arg5[%c552, %c0_50] : memref<592x32xf32, #tpu.memory_space<vmem>>, vector<1x8xf32>
      %98 = vector.broadcast %97 : vector<1x8xf32> to vector<2x8xf32>
      %99 = arith.mulf %96, %98 : vector<2x8xf32>
      %c560 = arith.constant 560 : index
      %c0_51 = arith.constant 0 : index
      %100 = vector.load %arg5[%c560, %c0_51] : memref<592x32xf32, #tpu.memory_space<vmem>>, vector<1x8xf32>
      %101 = vector.broadcast %100 : vector<1x8xf32> to vector<2x8xf32>
      %102 = arith.addf %99, %101 : vector<2x8xf32>
      %c568 = arith.constant 568 : index
      %c0_52 = arith.constant 0 : index
      %103 = vector.load %arg5[%c568, %c0_52] : memref<592x32xf32, #tpu.memory_space<vmem>>, vector<8x1xf32>
      %cst_53 = arith.constant dense<0.000000e+00> : vector<2x1xf32>
      %104 = tpu.matmul %102, %103, %cst_53 {dimension_numbers = #tpu.dot_dimension_numbers<[1], [0], [0], [1], [0, 0, 1, 1], [], []>} : vector<2x8xf32>, vector<8x1xf32>, vector<2x1xf32> -> vector<2x1xf32>
      %c576 = arith.constant 576 : index
      %c0_54 = arith.constant 0 : index
      %105 = vector.load %arg5[%c576, %c0_54] : memref<592x32xf32, #tpu.memory_space<vmem>>, vector<1x1xf32>
      %106 = vector.broadcast %105 : vector<1x1xf32> to vector<2x1xf32>
      %107 = arith.addf %104, %106 : vector<2x1xf32>
      %c0_55 = arith.constant 0 : index
      %c0_56 = arith.constant 0 : index
      %108 = vector.load %arg6[%c0_55, %c0_56] : memref<2x1xf32, #tpu.memory_space<vmem>>, vector<2x1xf32>
      tpu.vector_store %arg6[%c0_55, %c0_56], %107 {strides = array<i32>} : memref<2x1xf32, #tpu.memory_space<vmem>>, vector<2x1xf32>,
    } else {
    }
    return
  }
  func.func @transform_0(%arg0: i32) -> (i32, i32) {
    %c0_i32 = arith.constant 0 : i32
    %c0_i32_0 = arith.constant 0 : i32
    return %arg0, %c0_i32 : i32, i32
  }
  func.func @transform_1(%arg0: i32) -> (i32, i32) {
    %c0_i32 = arith.constant 0 : i32
    %c0_i32_0 = arith.constant 0 : i32
    return %arg0, %c0_i32 : i32, i32
  }
  func.func @transform_2(%arg0: i32) -> (i32, i32) {
    %c0_i32 = arith.constant 0 : i32
    %c0_i32_0 = arith.constant 0 : i32
    return %c0_i32, %arg0 : i32, i32
  }
  func.func @transform_3(%arg0: i32) -> (i32, i32) {
    %c0_i32 = arith.constant 0 : i32
    %c0_i32_0 = arith.constant 0 : i32
    %c0_i32_1 = arith.constant 0 : i32
    return %c0_i32, %c0_i32_0 : i32, i32
  }
  func.func @transform_4(%arg0: i32) -> (i32, i32) {
    %c0_i32 = arith.constant 0 : i32
    %c0_i32_0 = arith.constant 0 : i32
    %c0_i32_1 = arith.constant 0 : i32
    return %c0_i32, %c0_i32_0 : i32, i32
  }
  func.func @transform_5(%arg0: i32) -> (i32, i32) {
    %c0_i32 = arith.constant 0 : i32
    %c0_i32_0 = arith.constant 0 : i32
    %c0_i32_1 = arith.constant 0 : i32
    return %c0_i32, %c0_i32_0 : i32, i32
  }
}

</mosaic_0001>

<llo_original>
// kernel: tpu_custom_call.1
$region0: #{tpu_custom_call.1}
  #allocation0 [shape = 'u32[]', space=smem, size = 0x4, offset = 0x4, fixed_abs, tag = 'smem constant byte address 0x4 - core index']
  #allocation1 [shape = 'u32[144,128]{1,0:T(1,128)}', space=vmem, size = 0x12000, scoped, tag = 'internal scratch']
  #allocation2 [shape = 'f32[2,256]{1,0:T(2,128)}', space=vmem, size = 0x800, scoped, tag = 'scratch operand']
  %s0 = inlined_call_operand.vmem [shape: f32[16,8], index: 0, kind: input, shape index: {}]
  %s1 = inlined_call_operand.vmem [shape: f32[16,3], index: 1, kind: input, shape index: {}]
  %s2 = inlined_call_operand.vmem [shape: s32[1,16], index: 2, kind: input, shape index: {}]
  %s3 = inlined_call_operand.vmem [shape: f32[80,256], index: 3, kind: input, shape index: {}]
  %s4 = inlined_call_operand.vmem [shape: f32[592,32], index: 4, kind: input, shape index: {}]
  %s5 = inlined_call_operand.vmem [shape: f32[2,1], index: 5, kind: output, shape index: {}]
  %s6 = sld [smem:[#allocation0]]
  $region38: #{tpu_custom_call.1} parent=0
    _
  %s8 = ssub.s32 1, %s6
  %s9 = scalar_select 0, %s8, %s6
  // Predicated region
  $region2: #{tpu_custom_call.1} parent=0 // pred_check
    _
  $region3: #{tpu_custom_call.1} parent=0 // pred_check_branch
    %11 = sbr.rel (0) target = $region5
  $region4: #{tpu_custom_call.1} parent=0 // pred_region
    _
  $region5: #{tpu_custom_call.1} parent=0 // pred_fallthru
    _
  // Predicated region
  $region6: #{tpu_custom_call.1} parent=0 // pred_check
    _
  $region7: #{tpu_custom_call.1} parent=0 // pred_check_branch
    %13 = sbr.rel (0) target = $region9
  $region8: #{tpu_custom_call.1} parent=0 // pred_region
    _
  $region9: #{tpu_custom_call.1} parent=0 // pred_fallthru
    _
  // Predicated region
  $region10: #{tpu_custom_call.1} parent=0 // pred_check
    _
  $region11: #{tpu_custom_call.1} parent=0 // pred_check_branch
    %15 = sbr.rel (0) target = $region13
  $region12: #{tpu_custom_call.1} parent=0 // pred_region
    _
  $region13: #{tpu_custom_call.1} parent=0 // pred_fallthru
    _
  // Predicated region
  $region14: #{tpu_custom_call.1} parent=0 // pred_check
    _
  $region15: #{tpu_custom_call.1} parent=0 // pred_check_branch
    %17 = sbr.rel (0) target = $region17
  $region16: #{tpu_custom_call.1} parent=0 // pred_region
    _
  $region17: #{tpu_custom_call.1} parent=0 // pred_fallthru
    _
  // Predicated region
  $region18: #{tpu_custom_call.1} parent=0 // pred_check
    _
  $region19: #{tpu_custom_call.1} parent=0 // pred_check_branch
    %19 = sbr.rel (0) target = $region21
  $region20: #{tpu_custom_call.1} parent=0 // pred_region
    _
  $region21: #{tpu_custom_call.1} parent=0 // pred_fallthru
    _
  %p20 = scmp.eq.s32.totalorder 0, 0
  // Predicated region
  $region22: #{tpu_custom_call.1} parent=0 // pred_check
    %p21 = pneg %p20
  $region23: #{tpu_custom_call.1} parent=0 // pred_check_branch
    %23 = sbr.rel (%p21) target = $region25
  $region24: #{tpu_custom_call.1} parent=0 // pred_region
    %24 = vst [vmem:[#allocation2] sm:$0xf] 0.0
  $region25: #{tpu_custom_call.1} parent=0 // pred_fallthru
    _
  %v25 = vld [vmem:[%s0] sm:$0xff]
  %v26 = vld [vmem:[%s0 + $0x8] sm:$0xff]
  %v27 = vld [vmem:[%s1] sm:$0xff]
  %v28 = vld [vmem:[%s1 + $0x8] sm:$0xff]
  %v29 = vld [vmem:[%s2] sm:$0x1]
  %v30 = vld [vmem:[%s3 + $0x50] sm:$0xff]
  %v31 = vld [vmem:[%s3 + $0x60] ss:$0 sm:$0xff]
  %vm32 = vcmask 64512
  %v34 = vsel %vm32, %v25, 0
  %v37 = vsel %vm32, %v26, 0
  %39 = vmatprep.subr.mxu0 0.0
  %40 = vmatpush1.msra.mxu0 %v30
  %41 = vmatprep.subr.mxu0 0.0
  %42 = vmatpush1.msra.mxu0 0.0
  %43 = vmatprep.subr.mxu0 0.0
  %44 = vmatpush1.msra.mxu0 0.0
  %45 = vmatprep.subr.mxu0 0.0
  %46 = vmatpush1.msra.mxu0 0.0
  %47 = vmatprep.subr.mxu0 0.0
  %48 = vmatpush1.msra.mxu0 0.0
  %49 = vmatprep.subr.mxu0 0.0
  %50 = vmatpush1.msra.mxu0 0.0
  %51 = vmatprep.subr.mxu0 0.0
  %52 = vmatpush1.msra.mxu0 0.0
  %53 = vmatprep.subr.mxu0 0.0
  %54 = vmatpush1.msra.mxu0 0.0
  %55 = vmatprep.subr.mxu0 0.0
  %56 = vmatpush1.msra.mxu0 0.0
  %57 = vmatprep.subr.mxu0 0.0
  %58 = vmatpush1.msra.mxu0 0.0
  %59 = vmatprep.subr.mxu0 0.0
  %60 = vmatpush1.msra.mxu0 0.0
  %61 = vmatprep.subr.mxu0 0.0
  %62 = vmatpush1.msra.mxu0 0.0
  %63 = vmatprep.subr.mxu0 0.0
  %64 = vmatpush1.msra.mxu0 0.0
  %65 = vmatprep.subr.mxu0 0.0
  %66 = vmatpush1.msra.mxu0 0.0
  %67 = vmatprep.subr.mxu0 0.0
  %68 = vmatpush1.msra.mxu0 0.0
  %69 = vmatprep.subr.mxu0 0.0
  %70 = vmatpush1.msra.mxu0 0.0
  %71 = vmatprep.subr.mxu0 0.0
  %72 = vmatpush1.msra.mxu0 0.0
  %73 = vmatprep.subr.mxu0 0.0
  %74 = vmatpush1.msra.mxu0 0.0
  %75 = vmatprep.subr.mxu0 0.0
  %76 = vmatpush1.msra.mxu0 0.0
  %77 = vmatprep.subr.mxu0 0.0
  %78 = vmatpush1.msra.mxu0 0.0
  %79 = vmatprep.subr.mxu0 0.0
  %80 = vmatpush1.msra.mxu0 0.0
  %81 = vmatprep.subr.mxu0 0.0
  %82 = vmatpush1.msra.mxu0 0.0
  %83 = vmatprep.subr.mxu0 0.0
  %84 = vmatpush1.msra.mxu0 0.0
  %85 = vmatprep.subr.mxu0 0.0
  %86 = vmatpush1.msra.mxu0 0.0
  %87 = vmatprep.subr.mxu0 0.0
  %88 = vmatpush1.msra.mxu0 0.0
  %89 = vmatprep.subr.mxu0 0.0
  %90 = vmatpush1.msra.mxu0 0.0
  %91 = vmatprep.subr.mxu0 0.0
  %92 = vmatpush1.msra.mxu0 0.0
  %93 = vmatprep.subr.mxu0 0.0
  %94 = vmatpush1.msra.mxu0 0.0
  %95 = vmatprep.subr.mxu0 0.0
  %96 = vmatpush1.msra.mxu0 0.0
  %97 = vmatprep.subr.mxu0 0.0
  %98 = vmatpush1.msra.mxu0 0.0
  %99 = vmatprep.subr.mxu0 0.0
  %100 = vmatpush1.msra.mxu0 0.0
  %101 = vmatprep.subr.mxu0 0.0
  %102 = vmatpush1.msra.mxu0 0.0
  %103 = vmatprep.mubr.f32.mxu0 0.0
  %104 = vmatmul.mubr.f32.gmra.mrb[0].mxu0 %v34
  %v105 = vpop.f32.mrb[0].mxu0
  %v106 = vadd.f32 %v31, %v105
  %v107 = vpop.f32.mrb[0].mxu0
  %108 = vmatprep.mubr.f32.mxu0 0.0
  %109 = vmatmul.mubr.f32.gmra.mrb[0].mxu0 %v37
  %v110 = vpop.f32.mrb[0].mxu0
  %v111 = vadd.f32 %v31, %v110
  %v112 = vpop.f32.mrb[0].mxu0
  %113 = vdwg.mxu0
  %v114 = vld [vmem:[%s3 + $0x70] sm:$0x7]
  %vm115 = vcmask 23552
  %v117 = vsel %vm115, %v27, 0
  %v120 = vsel %vm115, %v28, 0
  %vm122 = vcmask 1042432
  %v124 = vsel %vm122, %v114, 0
  %126 = vmatprep.subr.mxu0 0.0
  %127 = vmatpush1.msra.mxu0 %v124
  %128 = vmatprep.subr.mxu0 0.0
  %129 = vmatpush1.msra.mxu0 0.0
  %130 = vmatprep.subr.mxu0 0.0
  %131 = vmatpush1.msra.mxu0 0.0
  %132 = vmatprep.subr.mxu0 0.0
  %133 = vmatpush1.msra.mxu0 0.0
  %134 = vmatprep.subr.mxu0 0.0
  %135 = vmatpush1.msra.mxu0 0.0
  %136 = vmatprep.subr.mxu0 0.0
  %137 = vmatpush1.msra.mxu0 0.0
  %138 = vmatprep.subr.mxu0 0.0
  %139 = vmatpush1.msra.mxu0 0.0
  %140 = vmatprep.subr.mxu0 0.0
  %141 = vmatpush1.msra.mxu0 0.0
  %142 = vmatprep.subr.mxu0 0.0
  %143 = vmatpush1.msra.mxu0 0.0
  %144 = vmatprep.subr.mxu0 0.0
  %145 = vmatpush1.msra.mxu0 0.0
  %146 = vmatprep.subr.mxu0 0.0
  %147 = vmatpush1.msra.mxu0 0.0
  %148 = vmatprep.subr.mxu0 0.0
  %149 = vmatpush1.msra.mxu0 0.0
  %150 = vmatprep.subr.mxu0 0.0
  %151 = vmatpush1.msra.mxu0 0.0
  %152 = vmatprep.subr.mxu0 0.0
  %153 = vmatpush1.msra.mxu0 0.0
  %154 = vmatprep.subr.mxu0 0.0
  %155 = vmatpush1.msra.mxu0 0.0
  %156 = vmatprep.subr.mxu0 0.0
  %157 = vmatpush1.msra.mxu0 0.0
  %158 = vmatprep.subr.mxu0 0.0
  %159 = vmatpush1.msra.mxu0 0.0
  %160 = vmatprep.subr.mxu0 0.0
  %161 = vmatpush1.msra.mxu0 0.0
  %162 = vmatprep.subr.mxu0 0.0
  %163 = vmatpush1.msra.mxu0 0.0
  %164 = vmatprep.subr.mxu0 0.0
  %165 = vmatpush1.msra.mxu0 0.0
  %166 = vmatprep.subr.mxu0 0.0
  %167 = vmatpush1.msra.mxu0 0.0
  %168 = vmatprep.subr.mxu0 0.0
  %169 = vmatpush1.msra.mxu0 0.0
  %170 = vmatprep.subr.mxu0 0.0
  %171 = vmatpush1.msra.mxu0 0.0
  %172 = vmatprep.subr.mxu0 0.0
  %173 = vmatpush1.msra.mxu0 0.0
  %174 = vmatprep.subr.mxu0 0.0
  %175 = vmatpush1.msra.mxu0 0.0
  %176 = vmatprep.subr.mxu0 0.0
  %177 = vmatpush1.msra.mxu0 0.0
  %178 = vmatprep.subr.mxu0 0.0
  %179 = vmatpush1.msra.mxu0 0.0
  %180 = vmatprep.subr.mxu0 0.0
  %181 = vmatpush1.msra.mxu0 0.0
  %182 = vmatprep.subr.mxu0 0.0
  %183 = vmatpush1.msra.mxu0 0.0
  %184 = vmatprep.subr.mxu0 0.0
  %185 = vmatpush1.msra.mxu0 0.0
  %186 = vmatprep.subr.mxu0 0.0
  %187 = vmatpush1.msra.mxu0 0.0
  %188 = vmatprep.subr.mxu0 0.0
  %189 = vmatpush1.msra.mxu0 0.0
  %190 = vmatprep.mubr.f32.mxu0 0.0
  %191 = vmatmul.mubr.f32.gmra.mrb[0].mxu0 %v117
  %v192 = vpop.f32.mrb[0].mxu0
  %v193 = vadd.f32 0.0, %v192
  %v194 = vpop.f32.mrb[0].mxu0
  %195 = vmatprep.mubr.f32.mxu0 0.0
  %196 = vmatmul.mubr.f32.gmra.mrb[0].mxu0 %v120
  %v197 = vpop.f32.mrb[0].mxu0
  %v198 = vadd.f32 0.0, %v197
  %v199 = vpop.f32.mrb[0].mxu0
  %200 = vdwg.mxu0
  %v201 = vmul.f32 %v27, %v27
  %v202 = vmul.f32 %v28, %v28
  %v203 = vsel %vm115, %v201, 0.0
  %204 = vadd.xlane.f32.xlu0 %v203
  %v205 = vpop.xlane.xlu0 %204
  %v206 = vsel %vm115, %v202, 0.0
  %207 = vadd.xlane.f32.xlu0 %v206
  %v208 = vpop.xlane.xlu0 %207
  %v209 = vld [vmem:[%s3 + $0x80] ss:$0 sm:$0xff]
  %v210 = vadd.f32 %v205, %v209
  %v211 = vadd.f32 %v208, %v209
  %v212 = vmul.f32 %v193, 2.0
  %v213 = vmul.f32 %v198, 2.0
  %v214 = vsub.f32 %v210, %v212
  %v215 = vsub.f32 %v211, %v213
  %v216 = vmax.f32 %v214, 0.0
  %v217 = vmax.f32 %v215, 0.0
  %v218 = vrsqrt.pop %v216
  %v219 = vmul.f32 %v216, %v218
  %vm220 = vcmp.eq.f32.partialorder %v216, inf
  %v221 = vsel %vm220, %v216, %v219
  %vm222 = vcmp.eq.f32.partialorder %v216, 0.0
  %v223 = vand.u32 %v216, 2147483648
  %v224 = vsel %vm222, %v223, %v221
  %v225 = vrsqrt.pop %v217
  %v226 = vmul.f32 %v217, %v225
  %vm227 = vcmp.eq.f32.partialorder %v217, inf
  %v228 = vsel %vm227, %v217, %v226
  %vm229 = vcmp.eq.f32.partialorder %v217, 0.0
  %v230 = vand.u32 %v217, 2147483648
  %v231 = vsel %vm229, %v230, %v228
  %v232 = vld [vmem:[%s3 + $0x90] ss:$0 sm:$0xff]
  %v233 = vmul.f32 %v224, %v232
  %v234 = vmul.f32 %v231, %v232
  %v235 = vmul.f32 %v233, 1.442695
  %v236 = vpow.pop %v235
  %v237 = vmul.f32 %v234, 1.442695
  %v238 = vpow.pop %v237
  %v239 = vld [vmem:[%s3 + $0x40] sm:$0xff]
  %v240 = vld [vmem:[%s3 + $0x48] sm:$0xff]
  %v242 = vsel %vm32, %v236, 0
  %v245 = vsel %vm32, %v238, 0
  %247 = vmatprep.subr.mxu0 %v240
  %248 = vmatpush1.msra.mxu0 %v239
  %249 = vmatprep.subr.mxu0 0.0
  %250 = vmatpush1.msra.mxu0 0.0
  %251 = vmatprep.subr.mxu0 0.0
  %252 = vmatpush1.msra.mxu0 0.0
  %253 = vmatprep.subr.mxu0 0.0
  %254 = vmatpush1.msra.mxu0 0.0
  %255 = vmatprep.subr.mxu0 0.0
  %256 = vmatpush1.msra.mxu0 0.0
  %257 = vmatprep.subr.mxu0 0.0
  %258 = vmatpush1.msra.mxu0 0.0
  %259 = vmatprep.subr.mxu0 0.0
  %260 = vmatpush1.msra.mxu0 0.0
  %261 = vmatprep.subr.mxu0 0.0
  %262 = vmatpush1.msra.mxu0 0.0
  %263 = vmatprep.subr.mxu0 0.0
  %264 = vmatpush1.msra.mxu0 0.0
  %265 = vmatprep.subr.mxu0 0.0
  %266 = vmatpush1.msra.mxu0 0.0
  %267 = vmatprep.subr.mxu0 0.0
  %268 = vmatpush1.msra.mxu0 0.0
  %269 = vmatprep.subr.mxu0 0.0
  %270 = vmatpush1.msra.mxu0 0.0
  %271 = vmatprep.subr.mxu0 0.0
  %272 = vmatpush1.msra.mxu0 0.0
  %273 = vmatprep.subr.mxu0 0.0
  %274 = vmatpush1.msra.mxu0 0.0
  %275 = vmatprep.subr.mxu0 0.0
  %276 = vmatpush1.msra.mxu0 0.0
  %277 = vmatprep.subr.mxu0 0.0
  %278 = vmatpush1.msra.mxu0 0.0
  %279 = vmatprep.subr.mxu0 0.0
  %280 = vmatpush1.msra.mxu0 0.0
  %281 = vmatprep.subr.mxu0 0.0
  %282 = vmatpush1.msra.mxu0 0.0
  %283 = vmatprep.subr.mxu0 0.0
  %284 = vmatpush1.msra.mxu0 0.0
  %285 = vmatprep.subr.mxu0 0.0
  %286 = vmatpush1.msra.mxu0 0.0
  %287 = vmatprep.subr.mxu0 0.0
  %288 = vmatpush1.msra.mxu0 0.0
  %289 = vmatprep.subr.mxu0 0.0
  %290 = vmatpush1.msra.mxu0 0.0
  %291 = vmatprep.subr.mxu0 0.0
  %292 = vmatpush1.msra.mxu0 0.0
  %293 = vmatprep.subr.mxu0 0.0
  %294 = vmatpush1.msra.mxu0 0.0
  %295 = vmatprep.subr.mxu0 0.0
  %296 = vmatpush1.msra.mxu0 0.0
  %297 = vmatprep.subr.mxu0 0.0
  %298 = vmatpush1.msra.mxu0 0.0
  %299 = vmatprep.subr.mxu0 0.0
  %300 = vmatpush1.msra.mxu0 0.0
  %301 = vmatprep.subr.mxu0 0.0
  %302 = vmatpush1.msra.mxu0 0.0
  %303 = vmatprep.subr.mxu0 0.0
  %304 = vmatpush1.msra.mxu0 0.0
  %305 = vmatprep.subr.mxu0 0.0
  %306 = vmatpush1.msra.mxu0 0.0
  %307 = vmatprep.subr.mxu0 0.0
  %308 = vmatpush1.msra.mxu0 0.0
  %309 = vmatprep.subr.mxu0 0.0
  %310 = vmatpush1.msra.mxu0 0.0
  %311 = vmatprep.mubr.f32.mxu0 0.0
  %312 = vmatmul.mubr.f32.gmra.mrb[0].mxu0 %v242
  %v313 = vpop.f32.mrb[0].mxu0
  %v314 = vadd.f32 0.0, %v313
  %v315 = vpop.f32.mrb[0].mxu0
  %v316 = vadd.f32 0.0, %v315
  %317 = vmatprep.mubr.f32.mxu0 0.0
  %318 = vmatmul.mubr.f32.gmra.mrb[0].mxu0 %v245
  %v319 = vpop.f32.mrb[0].mxu0
  %v320 = vadd.f32 0.0, %v319
  %v321 = vpop.f32.mrb[0].mxu0
  %v322 = vadd.f32 0.0, %v321
  %323 = vdwg.mxu0
  %v324 = vld [vmem:[%s3] sm:$0xff]
  %v325 = vld [vmem:[%s3 + $0x8] sm:$0xff]
  %v326 = vld [vmem:[%s3 + $0x10] sm:$0xff]
  %v327 = vld [vmem:[%s3 + $0x18] sm:$0xff]
  %v328 = vld [vmem:[%s3 + $0x20] sm:$0xff]
  %v329 = vld [vmem:[%s3 + $0x28] sm:$0xff]
  %v330 = vld [vmem:[%s3 + $0x30] sm:$0xff]
  %v331 = vld [vmem:[%s3 + $0x38] sm:$0xff]
  %vm332 = vcmask 261120
  %v334 = vsel %vm332, %v106, 0
  %v337 = vsel %vm332, %v111, 0
  %339 = vmatprep.subr.mxu0 %v325
  %340 = vmatpush1.msra.mxu0 %v324
  %341 = vmatprep.subr.mxu0 %v327
  %342 = vmatpush1.msra.mxu0 %v326
  %343 = vmatprep.subr.mxu0 %v329
  %344 = vmatpush1.msra.mxu0 %v328
  %345 = vmatprep.subr.mxu0 %v331
  %346 = vmatpush1.msra.mxu0 %v330
  %347 = vmatprep.subr.mxu0 0.0
  %348 = vmatpush1.msra.mxu0 0.0
  %349 = vmatprep.subr.mxu0 0.0
  %350 = vmatpush1.msra.mxu0 0.0
  %351 = vmatprep.subr.mxu0 0.0
  %352 = vmatpush1.msra.mxu0 0.0
  %353 = vmatprep.subr.mxu0 0.0
  %354 = vmatpush1.msra.mxu0 0.0
  %355 = vmatprep.subr.mxu0 0.0
  %356 = vmatpush1.msra.mxu0 0.0
  %357 = vmatprep.subr.mxu0 0.0
  %358 = vmatpush1.msra.mxu0 0.0
  %359 = vmatprep.subr.mxu0 0.0
  %360 = vmatpush1.msra.mxu0 0.0
  %361 = vmatprep.subr.mxu0 0.0
  %362 = vmatpush1.msra.mxu0 0.0
  %363 = vmatprep.subr.mxu0 0.0
  %364 = vmatpush1.msra.mxu0 0.0
  %365 = vmatprep.subr.mxu0 0.0
  %366 = vmatpush1.msra.mxu0 0.0
  %367 = vmatprep.subr.mxu0 0.0
  %368 = vmatpush1.msra.mxu0 0.0
  %369 = vmatprep.subr.mxu0 0.0
  %370 = vmatpush1.msra.mxu0 0.0
  %371 = vmatprep.subr.mxu0 0.0
  %372 = vmatpush1.msra.mxu0 0.0
  %373 = vmatprep.subr.mxu0 0.0
  %374 = vmatpush1.msra.mxu0 0.0
  %375 = vmatprep.subr.mxu0 0.0
  %376 = vmatpush1.msra.mxu0 0.0
  %377 = vmatprep.subr.mxu0 0.0
  %378 = vmatpush1.msra.mxu0 0.0
  %379 = vmatprep.subr.mxu0 0.0
  %380 = vmatpush1.msra.mxu0 0.0
  %381 = vmatprep.subr.mxu0 0.0
  %382 = vmatpush1.msra.mxu0 0.0
  %383 = vmatprep.subr.mxu0 0.0
  %384 = vmatpush1.msra.mxu0 0.0
  %385 = vmatprep.subr.mxu0 0.0
  %386 = vmatpush1.msra.mxu0 0.0
  %387 = vmatprep.subr.mxu0 0.0
  %388 = vmatpush1.msra.mxu0 0.0
  %389 = vmatprep.subr.mxu0 0.0
  %390 = vmatpush1.msra.mxu0 0.0
  %391 = vmatprep.subr.mxu0 0.0
  %392 = vmatpush1.msra.mxu0 0.0
  %393 = vmatprep.subr.mxu0 0.0
  %394 = vmatpush1.msra.mxu0 0.0
  %395 = vmatprep.subr.mxu0 0.0
  %396 = vmatpush1.msra.mxu0 0.0
  %397 = vmatprep.subr.mxu0 0.0
  %398 = vmatpush1.msra.mxu0 0.0
  %399 = vmatprep.subr.mxu0 0.0
  %400 = vmatpush1.msra.mxu0 0.0
  %401 = vmatprep.subr.mxu0 0.0
  %402 = vmatpush1.msra.mxu0 0.0
  %403 = vmatprep.mubr.f32.mxu0 0.0
  %404 = vmatmul.mubr.f32.gmra.mrb[0].mxu0 %v334
  %v405 = vpop.f32.mrb[0].mxu0
  %v406 = vadd.f32 0.0, %v405
  %v407 = vpop.f32.mrb[0].mxu0
  %v408 = vadd.f32 0.0, %v407
  %409 = vmatprep.mubr.f32.mxu0 0.0
  %410 = vmatmul.mubr.f32.gmra.mrb[0].mxu0 %v337
  %v411 = vpop.f32.mrb[0].mxu0
  %v412 = vadd.f32 0.0, %v411
  %v413 = vpop.f32.mrb[0].mxu0
  %v414 = vadd.f32 0.0, %v413
  %415 = vdwg.mxu0
  %v416 = vmul.f32 %v314, %v406
  %v417 = vmul.f32 %v316, %v408
  %v418 = vmul.f32 %v320, %v412
  %v419 = vmul.f32 %v322, %v414
  %v420 = vlaneseq
  %v421 = vshrl.u32 %v420, 7
  %v422 = vlaneseq
  %v423 = vshrl.u32 %v422, 7
  %v424 = vsub.s32 0, %v423
  %v425 = vrot.slane %v29, %v424
  %vm426 = vcmp.eq.s32.totalorder %v421, %v425
  %v427 = vsel %vm426, 1, 0
  %v428 = vcvt.s32.f32 %v427
  %v429 = vld [vmem:[#allocation2] sm:$0xf]
  %vm430 = vcmask 130048
  %v432 = vsel %vm430, %v428, 0
  %434 = vmatprep.subr.mxu0 %v417
  %435 = vmatpush1.msra.mxu0 %v416
  %436 = vmatprep.subr.mxu0 %v419
  %437 = vmatpush1.msra.mxu0 %v418
  %438 = vmatprep.subr.mxu0 0.0
  %439 = vmatpush1.msra.mxu0 0.0
  %440 = vmatprep.subr.mxu0 0.0
  %441 = vmatpush1.msra.mxu0 0.0
  %442 = vmatprep.subr.mxu0 0.0
  %443 = vmatpush1.msra.mxu0 0.0
  %444 = vmatprep.subr.mxu0 0.0
  %445 = vmatpush1.msra.mxu0 0.0
  %446 = vmatprep.subr.mxu0 0.0
  %447 = vmatpush1.msra.mxu0 0.0
  %448 = vmatprep.subr.mxu0 0.0
  %449 = vmatpush1.msra.mxu0 0.0
  %450 = vmatprep.subr.mxu0 0.0
  %451 = vmatpush1.msra.mxu0 0.0
  %452 = vmatprep.subr.mxu0 0.0
  %453 = vmatpush1.msra.mxu0 0.0
  %454 = vmatprep.subr.mxu0 0.0
  %455 = vmatpush1.msra.mxu0 0.0
  %456 = vmatprep.subr.mxu0 0.0
  %457 = vmatpush1.msra.mxu0 0.0
  %458 = vmatprep.subr.mxu0 0.0
  %459 = vmatpush1.msra.mxu0 0.0
  %460 = vmatprep.subr.mxu0 0.0
  %461 = vmatpush1.msra.mxu0 0.0
  %462 = vmatprep.subr.mxu0 0.0
  %463 = vmatpush1.msra.mxu0 0.0
  %464 = vmatprep.subr.mxu0 0.0
  %465 = vmatpush1.msra.mxu0 0.0
  %466 = vmatprep.subr.mxu0 0.0
  %467 = vmatpush1.msra.mxu0 0.0
  %468 = vmatprep.subr.mxu0 0.0
  %469 = vmatpush1.msra.mxu0 0.0
  %470 = vmatprep.subr.mxu0 0.0
  %471 = vmatpush1.msra.mxu0 0.0
  %472 = vmatprep.subr.mxu0 0.0
  %473 = vmatpush1.msra.mxu0 0.0
  %474 = vmatprep.subr.mxu0 0.0
  %475 = vmatpush1.msra.mxu0 0.0
  %476 = vmatprep.subr.mxu0 0.0
  %477 = vmatpush1.msra.mxu0 0.0
  %478 = vmatprep.subr.mxu0 0.0
  %479 = vmatpush1.msra.mxu0 0.0
  %480 = vmatprep.subr.mxu0 0.0
  %481 = vmatpush1.msra.mxu0 0.0
  %482 = vmatprep.subr.mxu0 0.0
  %483 = vmatpush1.msra.mxu0 0.0
  %484 = vmatprep.subr.mxu0 0.0
  %485 = vmatpush1.msra.mxu0 0.0
  %486 = vmatprep.subr.mxu0 0.0
  %487 = vmatpush1.msra.mxu0 0.0
  %488 = vmatprep.subr.mxu0 0.0
  %489 = vmatpush1.msra.mxu0 0.0
  %490 = vmatprep.subr.mxu0 0.0
  %491 = vmatpush1.msra.mxu0 0.0
  %492 = vmatprep.subr.mxu0 0.0
  %493 = vmatpush1.msra.mxu0 0.0
  %494 = vmatprep.subr.mxu0 0.0
  %495 = vmatpush1.msra.mxu0 0.0
  %496 = vmatprep.subr.mxu0 0.0
  %497 = vmatpush1.msra.mxu0 0.0
  %498 = vmatprep.mubr.f32.mxu0 0.0
  %499 = vmatmul.mubr.f32.gmra.mrb[0].mxu0 %v432
  %v500 = vpop.f32.mrb[0].mxu0
  %v501 = vadd.f32 0.0, %v500
  %v502 = vpop.f32.mrb[0].mxu0
  %v503 = vadd.f32 0.0, %v502
  %504 = vdwg.mxu0
  %v507 = vcombine.low %v501, %v503
  %v509 = vunpack.c.l.s4 1983009808
  %v510 = vunpack.c.0.s8 %v509
  %v511 = vlaneseq
  %v512 = vshrl.u32 %v511, 7
  %v513 = vsub.s32 %v510, %v512
  %v514 = vrot.slane %v507, %v513
  %v516 = vadd.f32 %v429, %v514
  %517 = vst [vmem:[#allocation2] sm:$0xf] %v516
  // Predicated region
  $region26: #{tpu_custom_call.1} parent=0 // pred_check
    %p518 = pneg %p20
  $region27: #{tpu_custom_call.1} parent=0 // pred_check_branch
    %520 = sbr.rel (%p518) target = $region29
  $region28: #{tpu_custom_call.1} parent=0 // pred_region
    %v521 = vld [vmem:[#allocation2] sm:$0xf]
    %v522 = vld [vmem:[%s4] sm:$0xff]
    %v523 = vld [vmem:[%s4 + $0x8] sm:$0xff]
    %v524 = vld [vmem:[%s4 + $0x10] sm:$0xff]
    %v525 = vld [vmem:[%s4 + $0x18] sm:$0xff]
    %v526 = vld [vmem:[%s4 + $0x20] sm:$0xff]
    %v527 = vld [vmem:[%s4 + $0x28] sm:$0xff]
    %v528 = vld [vmem:[%s4 + $0x30] sm:$0xff]
    %v529 = vld [vmem:[%s4 + $0x38] sm:$0xff]
    %v530 = vld [vmem:[%s4 + $0x40] sm:$0xff]
    %v531 = vld [vmem:[%s4 + $0x48] sm:$0xff]
    %v532 = vld [vmem:[%s4 + $0x50] sm:$0xff]
    %v533 = vld [vmem:[%s4 + $0x58] sm:$0xff]
    %v534 = vld [vmem:[%s4 + $0x60] sm:$0xff]
    %v535 = vld [vmem:[%s4 + $0x68] sm:$0xff]
    %v536 = vld [vmem:[%s4 + $0x70] sm:$0xff]
    %v537 = vld [vmem:[%s4 + $0x78] sm:$0xff]
    %v538 = vld [vmem:[%s4 + $0x80] sm:$0xff]
    %v539 = vld [vmem:[%s4 + $0x88] sm:$0xff]
    %v540 = vld [vmem:[%s4 + $0x90] sm:$0xff]
    %v541 = vld [vmem:[%s4 + $0x98] sm:$0xff]
    %v542 = vld [vmem:[%s4 + $0xa0] sm:$0xff]
    %v543 = vld [vmem:[%s4 + $0xa8] sm:$0xff]
    %v544 = vld [vmem:[%s4 + $0xb0] sm:$0xff]
    %v545 = vld [vmem:[%s4 + $0xb8] sm:$0xff]
    %v546 = vld [vmem:[%s4 + $0xc0] sm:$0xff]
    %v547 = vld [vmem:[%s4 + $0xc8] sm:$0xff]
    %v548 = vld [vmem:[%s4 + $0xd0] sm:$0xff]
    %v549 = vld [vmem:[%s4 + $0xd8] sm:$0xff]
    %v550 = vld [vmem:[%s4 + $0xe0] sm:$0xff]
    %v551 = vld [vmem:[%s4 + $0xe8] sm:$0xff]
    %v552 = vld [vmem:[%s4 + $0xf0] sm:$0xff]
    %v553 = vld [vmem:[%s4 + $0xf8] sm:$0xff]
    %v554 = vld [vmem:[%s4 + $0x248] sm:$0x1]
    %s556 = vtos %v554
    %v557 = vstv %s556
    %v561 = vunpack.c.l.s4 1983009808
    %v562 = vunpack.c.0.s8 %v561
    %v563 = vlaneseq
    %v564 = vshrl.u32 %v563, 7
    %v565 = vsub.s32 %v562, %v564
    %v566 = vrot.slane %v521, %v565
    %v567 = vcombine.high %v566, %v566
    %570 = vmatprep.subr.mxu0 0.0
    %571 = vmatpush1.msra.mxu0 %v522
    %572 = vmatprep.subr.mxu0 0.0
    %573 = vmatpush1.msra.mxu0 %v523
    %574 = vmatprep.subr.mxu0 0.0
    %575 = vmatpush1.msra.mxu0 %v524
    %576 = vmatprep.subr.mxu0 0.0
    %577 = vmatpush1.msra.mxu0 %v525
    %578 = vmatprep.subr.mxu0 0.0
    %579 = vmatpush1.msra.mxu0 %v526
    %580 = vmatprep.subr.mxu0 0.0
    %581 = vmatpush1.msra.mxu0 %v527
    %582 = vmatprep.subr.mxu0 0.0
    %583 = vmatpush1.msra.mxu0 %v528
    %584 = vmatprep.subr.mxu0 0.0
    %585 = vmatpush1.msra.mxu0 %v529
    %586 = vmatprep.subr.mxu0 0.0
    %587 = vmatpush1.msra.mxu0 %v530
    %588 = vmatprep.subr.mxu0 0.0
    %589 = vmatpush1.msra.mxu0 %v531
    %590 = vmatprep.subr.mxu0 0.0
    %591 = vmatpush1.msra.mxu0 %v532
    %592 = vmatprep.subr.mxu0 0.0
    %593 = vmatpush1.msra.mxu0 %v533
    %594 = vmatprep.subr.mxu0 0.0
    %595 = vmatpush1.msra.mxu0 %v534
    %596 = vmatprep.subr.mxu0 0.0
    %597 = vmatpush1.msra.mxu0 %v535
    %598 = vmatprep.subr.mxu0 0.0
    %599 = vmatpush1.msra.mxu0 %v536
    %600 = vmatprep.subr.mxu0 0.0
    %601 = vmatpush1.msra.mxu0 %v537
    %602 = vmatprep.subr.mxu0 0.0
    %603 = vmatpush1.msra.mxu0 %v538
    %604 = vmatprep.subr.mxu0 0.0
    %605 = vmatpush1.msra.mxu0 %v539
    %606 = vmatprep.subr.mxu0 0.0
    %607 = vmatpush1.msra.mxu0 %v540
    %608 = vmatprep.subr.mxu0 0.0
    %609 = vmatpush1.msra.mxu0 %v541
    %610 = vmatprep.subr.mxu0 0.0
    %611 = vmatpush1.msra.mxu0 %v542
    %612 = vmatprep.subr.mxu0 0.0
    %613 = vmatpush1.msra.mxu0 %v543
    %614 = vmatprep.subr.mxu0 0.0
    %615 = vmatpush1.msra.mxu0 %v544
    %616 = vmatprep.subr.mxu0 0.0
    %617 = vmatpush1.msra.mxu0 %v545
    %618 = vmatprep.subr.mxu0 0.0
    %619 = vmatpush1.msra.mxu0 %v546
    %620 = vmatprep.subr.mxu0 0.0
    %621 = vmatpush1.msra.mxu0 %v547
    %622 = vmatprep.subr.mxu0 0.0
    %623 = vmatpush1.msra.mxu0 %v548
    %624 = vmatprep.subr.mxu0 0.0
    %625 = vmatpush1.msra.mxu0 %v549
    %626 = vmatprep.subr.mxu0 0.0
    %627 = vmatpush1.msra.mxu0 %v550
    %628 = vmatprep.subr.mxu0 0.0
    %629 = vmatpush1.msra.mxu0 %v551
    %630 = vmatprep.subr.mxu0 0.0
    %631 = vmatpush1.msra.mxu0 %v552
    %632 = vmatprep.subr.mxu0 0.0
    %633 = vmatpush1.msra.mxu0 %v553
    %634 = vmatprep.mubr.f32.mxu0 %v567
    %635 = vmatmul.mubr.f32.gmra.mrb[0].mxu0 %v566
    %v636 = vpop.f32.mrb[0].mxu0
    %v637 = vadd.f32 %v557, %v636
    %v638 = vpop.f32.mrb[0].mxu0
    %639 = vdwg.mxu0
    %vm640 = vcmask 58368
    %v641 = vsel %vm640, %v637, -inf
    %642 = vmax.xlane.f32.xlu0 %v641
    %v643 = vpop.xlane.xlu0 %642
    %v644 = vsub.f32 %v637, %v643
    %v645 = vmul.f32 %v644, 1.442695
    %v646 = vpow.pop %v645
    %v647 = vsel %vm640, %v646, 0.0
    %648 = vadd.xlane.f32.xlu0 %v647
    %v649 = vpop.xlane.xlu0 %648
    %v650 = vrcp.pop %v649
    %v651 = vmul.f32 %v646, %v650
    %v652 = vld [vmem:[%s3 + $0x40] sm:$0xff]
    %v653 = vld [vmem:[%s3 + $0x48] sm:$0xff]
    %v655 = vsel %vm32, %v651, 0
    %657 = vmatprep.subr.mxu0 %v653
    %658 = vmatpush1.msra.mxu0 %v652
    %659 = vmatprep.subr.mxu0 0.0
    %660 = vmatpush1.msra.mxu0 0.0
    %661 = vmatprep.subr.mxu0 0.0
    %662 = vmatpush1.msra.mxu0 0.0
    %663 = vmatprep.subr.mxu0 0.0
    %664 = vmatpush1.msra.mxu0 0.0
    %665 = vmatprep.subr.mxu0 0.0
    %666 = vmatpush1.msra.mxu0 0.0
    %667 = vmatprep.subr.mxu0 0.0
    %668 = vmatpush1.msra.mxu0 0.0
    %669 = vmatprep.subr.mxu0 0.0
    %670 = vmatpush1.msra.mxu0 0.0
    %671 = vmatprep.subr.mxu0 0.0
    %672 = vmatpush1.msra.mxu0 0.0
    %673 = vmatprep.subr.mxu0 0.0
    %674 = vmatpush1.msra.mxu0 0.0
    %675 = vmatprep.subr.mxu0 0.0
    %676 = vmatpush1.msra.mxu0 0.0
    %677 = vmatprep.subr.mxu0 0.0
    %678 = vmatpush1.msra.mxu0 0.0
    %679 = vmatprep.subr.mxu0 0.0
    %680 = vmatpush1.msra.mxu0 0.0
    %681 = vmatprep.subr.mxu0 0.0
    %682 = vmatpush1.msra.mxu0 0.0
    %683 = vmatprep.subr.mxu0 0.0
    %684 = vmatpush1.msra.mxu0 0.0
    %685 = vmatprep.subr.mxu0 0.0
    %686 = vmatpush1.msra.mxu0 0.0
    %687 = vmatprep.subr.mxu0 0.0
    %688 = vmatpush1.msra.mxu0 0.0
    %689 = vmatprep.subr.mxu0 0.0
    %690 = vmatpush1.msra.mxu0 0.0
    %691 = vmatprep.subr.mxu0 0.0
    %692 = vmatpush1.msra.mxu0 0.0
    %693 = vmatprep.subr.mxu0 0.0
    %694 = vmatpush1.msra.mxu0 0.0
    %695 = vmatprep.subr.mxu0 0.0
    %696 = vmatpush1.msra.mxu0 0.0
    %697 = vmatprep.subr.mxu0 0.0
    %698 = vmatpush1.msra.mxu0 0.0
    %699 = vmatprep.subr.mxu0 0.0
    %700 = vmatpush1.msra.mxu0 0.0
    %701 = vmatprep.subr.mxu0 0.0
    %702 = vmatpush1.msra.mxu0 0.0
    %703 = vmatprep.subr.mxu0 0.0
    %704 = vmatpush1.msra.mxu0 0.0
    %705 = vmatprep.subr.mxu0 0.0
    %706 = vmatpush1.msra.mxu0 0.0
    %707 = vmatprep.subr.mxu0 0.0
    %708 = vmatpush1.msra.mxu0 0.0
    %709 = vmatprep.subr.mxu0 0.0
    %710 = vmatpush1.msra.mxu0 0.0
    %711 = vmatprep.subr.mxu0 0.0
    %712 = vmatpush1.msra.mxu0 0.0
    %713 = vmatprep.subr.mxu0 0.0
    %714 = vmatpush1.msra.mxu0 0.0
    %715 = vmatprep.subr.mxu0 0.0
    %716 = vmatpush1.msra.mxu0 0.0
    %717 = vmatprep.subr.mxu0 0.0
    %718 = vmatpush1.msra.mxu0 0.0
    %719 = vmatprep.subr.mxu0 0.0
    %720 = vmatpush1.msra.mxu0 0.0
    %721 = vmatprep.mubr.f32.mxu0 0.0
    %722 = vmatmul.mubr.f32.gmra.mrb[0].mxu0 %v655
    %v723 = vpop.f32.mrb[0].mxu0
    %v724 = vadd.f32 0.0, %v723
    %v725 = vpop.f32.mrb[0].mxu0
    %v726 = vadd.f32 0.0, %v725
    %727 = vdwg.mxu0
    %v730 = vcombine.low %v724, %v726
    %v732 = vunpack.c.l.s4 1983009808
    %v733 = vunpack.c.0.s8 %v732
    %v734 = vlaneseq
    %v735 = vshrl.u32 %v734, 7
    %v736 = vsub.s32 %v733, %v735
    %v737 = vrot.slane %v730, %v736
    %v739 = vmul.f32 %v521, %v737
    %v740 = vld [vmem:[%s4 + $0x100] sm:$0xff]
    %v741 = vld [vmem:[%s4 + $0x108] sm:$0xff]
    %v742 = vld [vmem:[%s4 + $0x110] sm:$0xff]
    %v743 = vld [vmem:[%s4 + $0x118] sm:$0xff]
    %v744 = vld [vmem:[%s4 + $0x120] sm:$0xff]
    %v745 = vld [vmem:[%s4 + $0x128] sm:$0xff]
    %v746 = vld [vmem:[%s4 + $0x130] sm:$0xff]
    %v747 = vld [vmem:[%s4 + $0x138] sm:$0xff]
    %v748 = vld [vmem:[%s4 + $0x140] sm:$0xff]
    %v749 = vld [vmem:[%s4 + $0x148] sm:$0xff]
    %v750 = vld [vmem:[%s4 + $0x150] sm:$0xff]
    %v751 = vld [vmem:[%s4 + $0x158] sm:$0xff]
    %v752 = vld [vmem:[%s4 + $0x160] sm:$0xff]
    %v753 = vld [vmem:[%s4 + $0x168] sm:$0xff]
    %v754 = vld [vmem:[%s4 + $0x170] sm:$0xff]
    %v755 = vld [vmem:[%s4 + $0x178] sm:$0xff]
    %v756 = vld [vmem:[%s4 + $0x180] sm:$0xff]
    %v757 = vld [vmem:[%s4 + $0x188] sm:$0xff]
    %v758 = vld [vmem:[%s4 + $0x190] sm:$0xff]
    %v759 = vld [vmem:[%s4 + $0x198] sm:$0xff]
    %v760 = vld [vmem:[%s4 + $0x1a0] sm:$0xff]
    %v761 = vld [vmem:[%s4 + $0x1a8] sm:$0xff]
    %v762 = vld [vmem:[%s4 + $0x1b0] sm:$0xff]
    %v763 = vld [vmem:[%s4 + $0x1b8] sm:$0xff]
    %v764 = vld [vmem:[%s4 + $0x1c0] sm:$0xff]
    %v765 = vld [vmem:[%s4 + $0x1c8] sm:$0xff]
    %v766 = vld [vmem:[%s4 + $0x1d0] sm:$0xff]
    %v767 = vld [vmem:[%s4 + $0x1d8] sm:$0xff]
    %v768 = vld [vmem:[%s4 + $0x1e0] sm:$0xff]
    %v769 = vld [vmem:[%s4 + $0x1e8] sm:$0xff]
    %v770 = vld [vmem:[%s4 + $0x1f0] sm:$0xff]
    %v771 = vld [vmem:[%s4 + $0x1f8] sm:$0xff]
    %v774 = vunpack.c.l.s4 1983009808
    %v775 = vunpack.c.0.s8 %v774
    %v776 = vlaneseq
    %v777 = vshrl.u32 %v776, 7
    %v778 = vsub.s32 %v775, %v777
    %v779 = vrot.slane %v739, %v778
    %v780 = vcombine.high %v779, %v779
    %783 = vmatprep.subr.mxu0 0.0
    %784 = vmatpush1.msra.mxu0 %v740
    %785 = vmatprep.subr.mxu0 0.0
    %786 = vmatpush1.msra.mxu0 %v741
    %787 = vmatprep.subr.mxu0 0.0
    %788 = vmatpush1.msra.mxu0 %v742
    %789 = vmatprep.subr.mxu0 0.0
    %790 = vmatpush1.msra.mxu0 %v743
    %791 = vmatprep.subr.mxu0 0.0
    %792 = vmatpush1.msra.mxu0 %v744
    %793 = vmatprep.subr.mxu0 0.0
    %794 = vmatpush1.msra.mxu0 %v745
    %795 = vmatprep.subr.mxu0 0.0
    %796 = vmatpush1.msra.mxu0 %v746
    %797 = vmatprep.subr.mxu0 0.0
    %798 = vmatpush1.msra.mxu0 %v747
    %799 = vmatprep.subr.mxu0 0.0
    %800 = vmatpush1.msra.mxu0 %v748
    %801 = vmatprep.subr.mxu0 0.0
    %802 = vmatpush1.msra.mxu0 %v749
    %803 = vmatprep.subr.mxu0 0.0
    %804 = vmatpush1.msra.mxu0 %v750
    %805 = vmatprep.subr.mxu0 0.0
    %806 = vmatpush1.msra.mxu0 %v751
    %807 = vmatprep.subr.mxu0 0.0
    %808 = vmatpush1.msra.mxu0 %v752
    %809 = vmatprep.subr.mxu0 0.0
    %810 = vmatpush1.msra.mxu0 %v753
    %811 = vmatprep.subr.mxu0 0.0
    %812 = vmatpush1.msra.mxu0 %v754
    %813 = vmatprep.subr.mxu0 0.0
    %814 = vmatpush1.msra.mxu0 %v755
    %815 = vmatprep.subr.mxu0 0.0
    %816 = vmatpush1.msra.mxu0 %v756
    %817 = vmatprep.subr.mxu0 0.0
    %818 = vmatpush1.msra.mxu0 %v757
    %819 = vmatprep.subr.mxu0 0.0
    %820 = vmatpush1.msra.mxu0 %v758
    %821 = vmatprep.subr.mxu0 0.0
    %822 = vmatpush1.msra.mxu0 %v759
    %823 = vmatprep.subr.mxu0 0.0
    %824 = vmatpush1.msra.mxu0 %v760
    %825 = vmatprep.subr.mxu0 0.0
    %826 = vmatpush1.msra.mxu0 %v761
    %827 = vmatprep.subr.mxu0 0.0
    %828 = vmatpush1.msra.mxu0 %v762
    %829 = vmatprep.subr.mxu0 0.0
    %830 = vmatpush1.msra.mxu0 %v763
    %831 = vmatprep.subr.mxu0 0.0
    %832 = vmatpush1.msra.mxu0 %v764
    %833 = vmatprep.subr.mxu0 0.0
    %834 = vmatpush1.msra.mxu0 %v765
    %835 = vmatprep.subr.mxu0 0.0
    %836 = vmatpush1.msra.mxu0 %v766
    %837 = vmatprep.subr.mxu0 0.0
    %838 = vmatpush1.msra.mxu0 %v767
    %839 = vmatprep.subr.mxu0 0.0
    %840 = vmatpush1.msra.mxu0 %v768
    %841 = vmatprep.subr.mxu0 0.0
    %842 = vmatpush1.msra.mxu0 %v769
    %843 = vmatprep.subr.mxu0 0.0
    %844 = vmatpush1.msra.mxu0 %v770
    %845 = vmatprep.subr.mxu0 0.0
    %846 = vmatpush1.msra.mxu0 %v771
    %847 = vmatprep.mubr.f32.mxu0 %v780
    %848 = vmatmul.mubr.f32.gmra.mrb[0].mxu0 %v779
    %v849 = vpop.f32.mrb[0].mxu0
    %v850 = vadd.f32 0.0, %v849
    %v851 = vpop.f32.mrb[0].mxu0
    %852 = vdwg.mxu0
    %v853 = vld [vmem:[%s4 + $0x200] sm:$0xff]
    %v854 = vld [vmem:[%s4 + $0x208] sm:$0xff]
    %v855 = vld [vmem:[%s4 + $0x210] sm:$0xff]
    %v856 = vld [vmem:[%s4 + $0x218] sm:$0xff]
    %v857 = vld [vmem:[%s4 + $0x220] sm:$0x1]
    %v858 = vlaneseq
    %v859 = vshrl.u32 %v858, 7
    %v860 = vsub.s32 0, %v859
    %v861 = vrot.slane %v857, %v860
    %v863 = vsel %vm332, %v850, 0
    %865 = vmatprep.subr.mxu0 0.0
    %866 = vmatpush1.msra.mxu0 %v853
    %867 = vmatprep.subr.mxu0 0.0
    %868 = vmatpush1.msra.mxu0 %v854
    %869 = vmatprep.subr.mxu0 0.0
    %870 = vmatpush1.msra.mxu0 %v855
    %871 = vmatprep.subr.mxu0 0.0
    %872 = vmatpush1.msra.mxu0 %v856
    %873 = vmatprep.subr.mxu0 0.0
    %874 = vmatpush1.msra.mxu0 0.0
    %875 = vmatprep.subr.mxu0 0.0
    %876 = vmatpush1.msra.mxu0 0.0
    %877 = vmatprep.subr.mxu0 0.0
    %878 = vmatpush1.msra.mxu0 0.0
    %879 = vmatprep.subr.mxu0 0.0
    %880 = vmatpush1.msra.mxu0 0.0
    %881 = vmatprep.subr.mxu0 0.0
    %882 = vmatpush1.msra.mxu0 0.0
    %883 = vmatprep.subr.mxu0 0.0
    %884 = vmatpush1.msra.mxu0 0.0
    %885 = vmatprep.subr.mxu0 0.0
    %886 = vmatpush1.msra.mxu0 0.0
    %887 = vmatprep.subr.mxu0 0.0
    %888 = vmatpush1.msra.mxu0 0.0
    %889 = vmatprep.subr.mxu0 0.0
    %890 = vmatpush1.msra.mxu0 0.0
    %891 = vmatprep.subr.mxu0 0.0
    %892 = vmatpush1.msra.mxu0 0.0
    %893 = vmatprep.subr.mxu0 0.0
    %894 = vmatpush1.msra.mxu0 0.0
    %895 = vmatprep.subr.mxu0 0.0
    %896 = vmatpush1.msra.mxu0 0.0
    %897 = vmatprep.subr.mxu0 0.0
    %898 = vmatpush1.msra.mxu0 0.0
    %899 = vmatprep.subr.mxu0 0.0
    %900 = vmatpush1.msra.mxu0 0.0
    %901 = vmatprep.subr.mxu0 0.0
    %902 = vmatpush1.msra.mxu0 0.0
    %903 = vmatprep.subr.mxu0 0.0
    %904 = vmatpush1.msra.mxu0 0.0
    %905 = vmatprep.subr.mxu0 0.0
    %906 = vmatpush1.msra.mxu0 0.0
    %907 = vmatprep.subr.mxu0 0.0
    %908 = vmatpush1.msra.mxu0 0.0
    %909 = vmatprep.subr.mxu0 0.0
    %910 = vmatpush1.msra.mxu0 0.0
    %911 = vmatprep.subr.mxu0 0.0
    %912 = vmatpush1.msra.mxu0 0.0
    %913 = vmatprep.subr.mxu0 0.0
    %914 = vmatpush1.msra.mxu0 0.0
    %915 = vmatprep.subr.mxu0 0.0
    %916 = vmatpush1.msra.mxu0 0.0
    %917 = vmatprep.subr.mxu0 0.0
    %918 = vmatpush1.msra.mxu0 0.0
    %919 = vmatprep.subr.mxu0 0.0
    %920 = vmatpush1.msra.mxu0 0.0
    %921 = vmatprep.subr.mxu0 0.0
    %922 = vmatpush1.msra.mxu0 0.0
    %923 = vmatprep.subr.mxu0 0.0
    %924 = vmatpush1.msra.mxu0 0.0
    %925 = vmatprep.subr.mxu0 0.0
    %926 = vmatpush1.msra.mxu0 0.0
    %927 = vmatprep.subr.mxu0 0.0
    %928 = vmatpush1.msra.mxu0 0.0
    %929 = vmatprep.mubr.f32.mxu0 0.0
    %930 = vmatmul.mubr.f32.gmra.mrb[0].mxu0 %v863
    %v931 = vpop.f32.mrb[0].mxu0
    %v932 = vadd.f32 %v861, %v931
    %v933 = vpop.f32.mrb[0].mxu0
    %934 = vdwg.mxu0
    %vm935 = vcmp.ge.f32.partialorder %v932, 0.0
    %v936 = vmul.f32 %v932, 0.2
    %v937 = vsel %vm935, %v932, %v936
    %v938 = vsel %vm640, %v937, 0.0
    %939 = vadd.xlane.f32.xlu0 %v938
    %v940 = vpop.xlane.xlu0 %939
    %v941 = vrcp.pop 8.0
    %v942 = vmul.f32 %v940, %v941
    %v943 = vsub.f32 %v937, %v942
    %v944 = vmul.f32 %v943, %v943
    %v945 = vsel %vm640, %v944, 0.0
    %946 = vadd.xlane.f32.xlu0 %v945
    %v947 = vpop.xlane.xlu0 %946
    %v948 = vmul.f32 %v947, %v941
    %v949 = vadd.f32 %v948, 1e-05
    %v950 = vrsqrt.pop %v949
    %v951 = vmul.f32 %v943, %v950
    %v952 = vld [vmem:[%s4 + $0x228] sm:$0x1]
    %v953 = vlaneseq
    %v954 = vshrl.u32 %v953, 7
    %v955 = vsub.s32 0, %v954
    %v956 = vrot.slane %v952, %v955
    %v957 = vmul.f32 %v951, %v956
    %v958 = vld [vmem:[%s4 + $0x230] sm:$0x1]
    %v959 = vlaneseq
    %v960 = vshrl.u32 %v959, 7
    %v961 = vsub.s32 0, %v960
    %v962 = vrot.slane %v958, %v961
    %v963 = vadd.f32 %v957, %v962
    %v964 = vld [vmem:[%s4 + $0x238] sm:$0xff]
    %v965 = vld [vmem:[%s4 + $0x240] sm:$0x1]
    %v966 = vlaneseq
    %v967 = vshrl.u32 %v966, 7
    %v968 = vsub.s32 0, %v967
    %v969 = vrot.slane %v965, %v968
    %v971 = vsel %vm32, %v963, 0
    %973 = vmatprep.subr.mxu0 0.0
    %974 = vmatpush1.msra.mxu0 %v964
    %975 = vmatprep.subr.mxu0 0.0
    %976 = vmatpush1.msra.mxu0 0.0
    %977 = vmatprep.subr.mxu0 0.0
    %978 = vmatpush1.msra.mxu0 0.0
    %979 = vmatprep.subr.mxu0 0.0
    %980 = vmatpush1.msra.mxu0 0.0
    %981 = vmatprep.subr.mxu0 0.0
    %982 = vmatpush1.msra.mxu0 0.0
    %983 = vmatprep.subr.mxu0 0.0
    %984 = vmatpush1.msra.mxu0 0.0
    %985 = vmatprep.subr.mxu0 0.0
    %986 = vmatpush1.msra.mxu0 0.0
    %987 = vmatprep.subr.mxu0 0.0
    %988 = vmatpush1.msra.mxu0 0.0
    %989 = vmatprep.subr.mxu0 0.0
    %990 = vmatpush1.msra.mxu0 0.0
    %991 = vmatprep.subr.mxu0 0.0
    %992 = vmatpush1.msra.mxu0 0.0
    %993 = vmatprep.subr.mxu0 0.0
    %994 = vmatpush1.msra.mxu0 0.0
    %995 = vmatprep.subr.mxu0 0.0
    %996 = vmatpush1.msra.mxu0 0.0
    %997 = vmatprep.subr.mxu0 0.0
    %998 = vmatpush1.msra.mxu0 0.0
    %999 = vmatprep.subr.mxu0 0.0
    %1000 = vmatpush1.msra.mxu0 0.0
    %1001 = vmatprep.subr.mxu0 0.0
    %1002 = vmatpush1.msra.mxu0 0.0
    %1003 = vmatprep.subr.mxu0 0.0
    %1004 = vmatpush1.msra.mxu0 0.0
    %1005 = vmatprep.subr.mxu0 0.0
    %1006 = vmatpush1.msra.mxu0 0.0
    %1007 = vmatprep.subr.mxu0 0.0
    %1008 = vmatpush1.msra.mxu0 0.0
    %1009 = vmatprep.subr.mxu0 0.0
    %1010 = vmatpush1.msra.mxu0 0.0
    %1011 = vmatprep.subr.mxu0 0.0
    %1012 = vmatpush1.msra.mxu0 0.0
    %1013 = vmatprep.subr.mxu0 0.0
    %1014 = vmatpush1.msra.mxu0 0.0
    %1015 = vmatprep.subr.mxu0 0.0
    %1016 = vmatpush1.msra.mxu0 0.0
    %1017 = vmatprep.subr.mxu0 0.0
    %1018 = vmatpush1.msra.mxu0 0.0
    %1019 = vmatprep.subr.mxu0 0.0
    %1020 = vmatpush1.msra.mxu0 0.0
    %1021 = vmatprep.subr.mxu0 0.0
    %1022 = vmatpush1.msra.mxu0 0.0
    %1023 = vmatprep.subr.mxu0 0.0
    %1024 = vmatpush1.msra.mxu0 0.0
    %1025 = vmatprep.subr.mxu0 0.0
    %1026 = vmatpush1.msra.mxu0 0.0
    %1027 = vmatprep.subr.mxu0 0.0
    %1028 = vmatpush1.msra.mxu0 0.0
    %1029 = vmatprep.subr.mxu0 0.0
    %1030 = vmatpush1.msra.mxu0 0.0
    %1031 = vmatprep.subr.mxu0 0.0
    %1032 = vmatpush1.msra.mxu0 0.0
    %1033 = vmatprep.subr.mxu0 0.0
    %1034 = vmatpush1.msra.mxu0 0.0
    %1035 = vmatprep.subr.mxu0 0.0
    %1036 = vmatpush1.msra.mxu0 0.0
    %1037 = vmatprep.mubr.f32.mxu0 0.0
    %1038 = vmatmul.mubr.f32.gmra.mrb[0].mxu0 %v971
    %v1039 = vpop.f32.mrb[0].mxu0
    %v1040 = vadd.f32 %v969, %v1039
    %v1041 = vpop.f32.mrb[0].mxu0
    %1042 = vdwg.mxu0
    %vm1043 = vcmask 1024
    %1044 = vst.msk [vmem:[%s5] sm:$0x3] %vm1043, %v1040
  $region29: #{tpu_custom_call.1} parent=0 // pred_fallthru
    _
  // Predicated region
  $region30: #{tpu_custom_call.1} parent=0 // pred_check
    _
  $region31: #{tpu_custom_call.1} parent=0 // pred_check_branch
    %1046 = sbr.rel (0) target = $region33
  $region32: #{tpu_custom_call.1} parent=0 // pred_region
    _
  $region33: #{tpu_custom_call.1} parent=0 // pred_fallthru
    _
  // Predicated region
  $region34: #{tpu_custom_call.1} parent=0 // pred_check
    _
  $region35: #{tpu_custom_call.1} parent=0 // pred_check_branch
    %1048 = sbr.rel (0) target = $region37
  $region36: #{tpu_custom_call.1} parent=0 // pred_region
    _
  $region37: #{tpu_custom_call.1} parent=0 // pred_fallthru
    _

</llo_original>
